<compile_context>
chip_gen: v7x
topology: tpu7x:2x2x1
jax: 0.10.0
libtpu: 0.0.40
codegen_flags: <defaults>
</compile_context>

<pallas_src>
import functools

import jax
import jax.numpy as jnp
from jax import lax
from jax.experimental import pallas as pl
from jax.experimental.pallas import tpu as pltpu

MAX_BLOCK_B = 4096  # batch-tile cap; ~6 MiB of VMEM per step at f32


def mlp_kernel(x_ref, w1_ref, b1_ref, w2_ref, b2_ref, w3_ref, b3_ref, oT_ref):
    """One batch tile of the 3-layer MLP.

    x_ref:  (TB, d_in)  -- native row-major input tile (batch on sublanes).
    oT_ref: (d_out, TB) -- transposed, lane-dense output tile (batch on lanes).
    Weights are PyTorch layout (d_out, d_in); biases (d_out, 1).
    """
    x = x_ref[...]
    # h1^T = W1 @ x^T without materializing x^T: contract the feature (last) dims of both.
    h1 = lax.dot_general(w1_ref[...], x, (((1,), (1,)), ((), ())),
                         preferred_element_type=jnp.float32)           # (H1, TB)
    h1 = jnp.maximum(h1 + b1_ref[...], 0.0)
    h2 = jnp.dot(w2_ref[...], h1, preferred_element_type=jnp.float32)  # (H2, TB)
    h2 = jnp.maximum(h2 + b2_ref[...], 0.0)
    o = jnp.dot(w3_ref[...], h2, preferred_element_type=jnp.float32)   # (D_OUT, TB)
    oT_ref[...] = (o + b3_ref[...]).astype(oT_ref.dtype)


def _resident_spec(shape):
    # Whole-array block that stays VMEM-resident across all batch tiles.
    return pl.BlockSpec(shape, lambda i: (0,) * len(shape))


def _default_block_b(B):
    # v5e/v6e (1 TC): fewest, largest tiles -> one full-array block when B fits.
    # Larger B: 4096-wide tiles keep the ~0.35 us/step overhead small vs the per-step
    # HBM traffic while staying trivially inside VMEM on all generations.
    # TODO(synk): on v7x with moderate B, prefer an even number (>=2) of tiles so both
    # TensorCores get work under dimension_semantics=("parallel",).
    return B if B <= MAX_BLOCK_B else MAX_BLOCK_B


@functools.partial(jax.jit, static_argnames=("block_b",))
def fully_connected_net_transposed(x, w1, b1, w2, b2, w3, b3, *, block_b=None):
    """MLP forward, output in lane-dense transposed layout: (d_out, B)."""
    B, d_in = x.shape
    d_out = w3.shape[0]
    if block_b is None:
        block_b = _default_block_b(B)
    num_tiles = pl.cdiv(B, block_b)
    # PyTorch-shaped (d_out,) biases -> (d_out, 1) columns for broadcast over (d_out, TB).
    b1c, b2c, b3c = (b.reshape(-1, 1) for b in (b1, b2, b3))

    return pl.pallas_call(
        mlp_kernel,
        out_shape=jax.ShapeDtypeStruct((d_out, B), x.dtype),
        grid=(num_tiles,),
        in_specs=[
            pl.BlockSpec((block_b, d_in), lambda i: (i, 0)),  # x batch tile: no pad, no transpose
            _resident_spec(w1.shape), _resident_spec(b1c.shape),
            _resident_spec(w2.shape), _resident_spec(b2c.shape),
            _resident_spec(w3.shape), _resident_spec(b3c.shape),
        ],
        out_specs=pl.BlockSpec((d_out, block_b), lambda i: (0, i)),
        compiler_params=pltpu.CompilerParams(
            dimension_semantics=("parallel",)),
    )(x, w1, b1c, w2, b2c, w3, b3c)


@functools.partial(jax.jit, static_argnames=("block_b",))
def fully_connected_net(x, w1, b1, w2, b2, w3, b3, *, block_b=None):
    """nn.Module-compatible forward: x (B, d_in) -> (B, d_out)."""
    # The trailing .T costs ~64 B/row of HBM; layout-aware callers should use
    # fully_connected_net_transposed() directly and keep batch on the lane axis downstream.
    return fully_connected_net_transposed(x, w1, b1, w2, b2, w3, b3, block_b=block_b).T


def init_linear(key, d_in, d_out):
    # nn.Linear default init: U(-1/sqrt(d_in), 1/sqrt(d_in)); PyTorch layout (d_out, d_in), (d_out,).
    kw, kb = jax.random.split(key)
    bound = 1.0 / jnp.sqrt(jnp.float32(d_in))
    w = jax.random.uniform(kw, (d_out, d_in), jnp.float32, -bound, bound)
    b = jax.random.uniform(kb, (d_out,), jnp.float32, -bound, bound)
    return w, b


def reference_mlp(x, w1, b1, w2, b2, w3, b3):
    h1 = jnp.maximum(x @ w1.T + b1, 0.0)
    h2 = jnp.maximum(h1 @ w2.T + b2, 0.0)
    return h2 @ w3.T + b3


if __name__ == "__main__":
    key = jax.random.PRNGKey(0)
    k_x, k1, k2, k3 = jax.random.split(key, 4)

    # B=400 is not a multiple of 128: exercises the full-array single-tile default and the
    # ragged-last-block multi-tile path below.
    B, D_IN, H1, H2, D_OUT = 400, 16, 32, 32, 8

    x = jax.random.normal(k_x, (B, D_IN), jnp.float32)
    w1, b1 = init_linear(k1, D_IN, H1)
    w2, b2 = init_linear(k2, H1, H2)
    w3, b3 = init_linear(k3, H2, D_OUT)

    ref = reference_mlp(x, w1, b1, w2, b2, w3, b3)

    # Default: a single full-batch tile (best for v5e/v6e's single TensorCore).
    out = jax.block_until_ready(fully_connected_net(x, w1, b1, w2, b2, w3, b3))
    assert out.shape == (B, D_OUT)
    assert jnp.allclose(out, ref, atol=1e-5, rtol=1e-5)

    # Multi-tile path with a ragged last block (400 = 3*128 + 16): exercises the pipelined
    # grid and Pallas partial-block masking without any jnp.pad HBM round-trip.
    out_tiled = jax.block_until_ready(
        fully_connected_net(x, w1, b1, w2, b2, w3, b3, block_b=128))
    assert jnp.allclose(out_tiled, ref, atol=1e-5, rtol=1e-5)

    print("KERNEL_OK")
</pallas_src>

<mosaic_0001>
module attributes {stable_mosaic.version = 11 : i64} {
  func.func @mlp_kernel(%arg0: i32, %arg1: memref<400x16xf32, #tpu.memory_space<vmem>>, %arg2: memref<32x16xf32, #tpu.memory_space<vmem>>, %arg3: memref<32x1xf32, #tpu.memory_space<vmem>>, %arg4: memref<32x32xf32, #tpu.memory_space<vmem>>, %arg5: memref<32x1xf32, #tpu.memory_space<vmem>>, %arg6: memref<8x32xf32, #tpu.memory_space<vmem>>, %arg7: memref<8x1xf32, #tpu.memory_space<vmem>>, %arg8: memref<8x400xf32, #tpu.memory_space<vmem>>) attributes {dimension_semantics = [#tpu.dimension_semantics<parallel>], iteration_bounds = array<i64: 1>, scalar_prefetch = 0 : i64, scratch_operands = 0 : i64, tpu.core_type = #tpu.core_type<tc>, window_params = [{transform_indices = @transform_0, window_bounds = array<i64: 400, 16>}, {pipeline_mode = #tpu.pipeline_mode<synchronous>, transform_indices = @transform_1, window_bounds = array<i64: 32, 16>}, {pipeline_mode = #tpu.pipeline_mode<synchronous>, transform_indices = @transform_2, window_bounds = array<i64: 32, 1>}, {pipeline_mode = #tpu.pipeline_mode<synchronous>, transform_indices = @transform_3, window_bounds = array<i64: 32, 32>}, {pipeline_mode = #tpu.pipeline_mode<synchronous>, transform_indices = @transform_4, window_bounds = array<i64: 32, 1>}, {pipeline_mode = #tpu.pipeline_mode<synchronous>, transform_indices = @transform_5, window_bounds = array<i64: 8, 32>}, {pipeline_mode = #tpu.pipeline_mode<synchronous>, transform_indices = @transform_6, window_bounds = array<i64: 8, 1>}, {transform_indices = @transform_7, window_bounds = array<i64: 8, 400>}]} {
    %c0 = arith.constant 0 : index
    %c0_0 = arith.constant 0 : index
    %0 = vector.load %arg1[%c0, %c0_0] : memref<400x16xf32, #tpu.memory_space<vmem>>, vector<400x16xf32>
    %c0_1 = arith.constant 0 : index
    %c0_2 = arith.constant 0 : index
    %1 = vector.load %arg2[%c0_1, %c0_2] : memref<32x16xf32, #tpu.memory_space<vmem>>, vector<32x16xf32>
    %cst = arith.constant dense<0.000000e+00> : vector<32x400xf32>
    %2 = tpu.matmul %1, %0, %cst {dimension_numbers = #tpu.dot_dimension_numbers<[1], [1], [0], [0], [0, 0, 1, 0], [], []>} : vector<32x16xf32>, vector<400x16xf32>, vector<32x400xf32> -> vector<32x400xf32>
    %c0_3 = arith.constant 0 : index
    %c0_4 = arith.constant 0 : index
    %3 = vector.load %arg3[%c0_3, %c0_4] : memref<32x1xf32, #tpu.memory_space<vmem>>, vector<32x1xf32>
    %4 = vector.broadcast %3 : vector<32x1xf32> to vector<32x400xf32>
    %5 = arith.addf %2, %4 : vector<32x400xf32>
    %cst_5 = arith.constant 0.000000e+00 : f32
    %6 = vector.broadcast %cst_5 : f32 to vector<32x400xf32>
    %7 = arith.maximumf %5, %6 : vector<32x400xf32>
    %c0_6 = arith.constant 0 : index
    %c0_7 = arith.constant 0 : index
    %8 = vector.load %arg4[%c0_6, %c0_7] : memref<32x32xf32, #tpu.memory_space<vmem>>, vector<32x32xf32>
    %cst_8 = arith.constant dense<0.000000e+00> : vector<32x400xf32>
    %9 = tpu.matmul %8, %7, %cst_8 {dimension_numbers = #tpu.dot_dimension_numbers<[1], [0], [0], [1], [0, 0, 1, 1], [], []>} : vector<32x32xf32>, vector<32x400xf32>, vector<32x400xf32> -> vector<32x400xf32>
    %c0_9 = arith.constant 0 : index
    %c0_10 = arith.constant 0 : index
    %10 = vector.load %arg5[%c0_9, %c0_10] : memref<32x1xf32, #tpu.memory_space<vmem>>, vector<32x1xf32>
    %11 = vector.broadcast %10 : vector<32x1xf32> to vector<32x400xf32>
    %12 = arith.addf %9, %11 : vector<32x400xf32>
    %cst_11 = arith.constant 0.000000e+00 : f32
    %13 = vector.broadcast %cst_11 : f32 to vector<32x400xf32>
    %14 = arith.maximumf %12, %13 : vector<32x400xf32>
    %c0_12 = arith.constant 0 : index
    %c0_13 = arith.constant 0 : index
    %15 = vector.load %arg6[%c0_12, %c0_13] : memref<8x32xf32, #tpu.memory_space<vmem>>, vector<8x32xf32>
    %cst_14 = arith.constant dense<0.000000e+00> : vector<8x400xf32>
    %16 = tpu.matmul %15, %14, %cst_14 {dimension_numbers = #tpu.dot_dimension_numbers<[1], [0], [0], [1], [0, 0, 1, 1], [], []>} : vector<8x32xf32>, vector<32x400xf32>, vector<8x400xf32> -> vector<8x400xf32>
    %c0_15 = arith.constant 0 : index
    %c0_16 = arith.constant 0 : index
    %17 = vector.load %arg7[%c0_15, %c0_16] : memref<8x1xf32, #tpu.memory_space<vmem>>, vector<8x1xf32>
    %18 = vector.broadcast %17 : vector<8x1xf32> to vector<8x400xf32>
    %19 = arith.addf %16, %18 : vector<8x400xf32>
    %c0_17 = arith.constant 0 : index
    %c0_18 = arith.constant 0 : index
    %20 = vector.load %arg8[%c0_17, %c0_18] : memref<8x400xf32, #tpu.memory_space<vmem>>, vector<8x400xf32>
    tpu.vector_store %arg8[%c0_17, %c0_18], %19 {strides = array<i32>} : memref<8x400xf32, #tpu.memory_space<vmem>>, vector<8x400xf32>,
    return
  }
  func.func @transform_0(%arg0: i32) -> (i32, i32) {
    %c0_i32 = arith.constant 0 : i32
    %c0_i32_0 = arith.constant 0 : i32
    return %arg0, %c0_i32 : i32, i32
  }
  func.func @transform_1(%arg0: i32) -> (i32, i32) {
    %c0_i32 = arith.constant 0 : i32
    %c0_i32_0 = arith.constant 0 : i32
    %c0_i32_1 = arith.constant 0 : i32
    return %c0_i32, %c0_i32_0 : i32, i32
  }
  func.func @transform_2(%arg0: i32) -> (i32, i32) {
    %c0_i32 = arith.constant 0 : i32
    %c0_i32_0 = arith.constant 0 : i32
    %c0_i32_1 = arith.constant 0 : i32
    return %c0_i32, %c0_i32_0 : i32, i32
  }
  func.func @transform_3(%arg0: i32) -> (i32, i32) {
    %c0_i32 = arith.constant 0 : i32
    %c0_i32_0 = arith.constant 0 : i32
    %c0_i32_1 = arith.constant 0 : i32
    return %c0_i32, %c0_i32_0 : i32, i32
  }
  func.func @transform_4(%arg0: i32) -> (i32, i32) {
    %c0_i32 = arith.constant 0 : i32
    %c0_i32_0 = arith.constant 0 : i32
    %c0_i32_1 = arith.constant 0 : i32
    return %c0_i32, %c0_i32_0 : i32, i32
  }
  func.func @transform_5(%arg0: i32) -> (i32, i32) {
    %c0_i32 = arith.constant 0 : i32
    %c0_i32_0 = arith.constant 0 : i32
    %c0_i32_1 = arith.constant 0 : i32
    return %c0_i32, %c0_i32_0 : i32, i32
  }
  func.func @transform_6(%arg0: i32) -> (i32, i32) {
    %c0_i32 = arith.constant 0 : i32
    %c0_i32_0 = arith.constant 0 : i32
    %c0_i32_1 = arith.constant 0 : i32
    return %c0_i32, %c0_i32_0 : i32, i32
  }
  func.func @transform_7(%arg0: i32) -> (i32, i32) {
    %c0_i32 = arith.constant 0 : i32
    %c0_i32_0 = arith.constant 0 : i32
    return %c0_i32, %arg0 : i32, i32
  }
}

</mosaic_0001>

<llo_original>
// kernel: fully_connected_net_transposed.1
$region0: #{fully_connected_net_transposed.1}
  #allocation0 [shape = 'u32[]', space=smem, size = 0x4, offset = 0x4, fixed_abs, tag = 'smem constant byte address 0x4 - core index']
  #allocation1 [shape = 'u32[144,128]{1,0:T(1,128)}', space=vmem, size = 0x12000, scoped, tag = 'internal scratch']
  %s0 = inlined_call_operand.vmem [shape: f32[400,16], index: 0, kind: input, shape index: {}]
  %s1 = inlined_call_operand.vmem [shape: f32[32,16], index: 1, kind: input, shape index: {}]
  %s2 = inlined_call_operand.vmem [shape: f32[32,1], index: 2, kind: input, shape index: {}]
  %s3 = inlined_call_operand.vmem [shape: f32[32,32], index: 3, kind: input, shape index: {}]
  %s4 = inlined_call_operand.vmem [shape: f32[32,1], index: 4, kind: input, shape index: {}]
  %s5 = inlined_call_operand.vmem [shape: f32[8,32], index: 5, kind: input, shape index: {}]
  %s6 = inlined_call_operand.vmem [shape: f32[8,1], index: 6, kind: input, shape index: {}]
  %s7 = inlined_call_operand.hbm [shape: f32[8,400], index: 7, kind: output, shape index: {}]
  %s8 = sld [smem:[#allocation0]]
  $region38: #{fully_connected_net_transposed.1} parent=0
    _
  %s10 = ssub.s32 1, %s8
  %s11 = scalar_select 0, %s10, %s8
  $region1: #{fully_connected_net_transposed.1} parent=0
    #allocation2 [shape = 'u8[16384]{0}', space=vmem, size = 0x4000, scoped, tag = 'output window, operand 0, single buffered']
    #allocation3 [shape = 's32[1]{0}', space=sflag, size = 0x4, scoped, tag = 'scoped memory for fully_connected_net_transposed.1']
    %12 = vsyncpa [#allocation3], 0
    // Predicated region
    $region2: #{fully_connected_net_transposed.1} parent=1 // pred_check
      _
    $region3: #{fully_connected_net_transposed.1} parent=1 // pred_check_branch
      %14 = sbr.rel (0) target = $region5
    $region4: #{fully_connected_net_transposed.1} parent=1 // pred_region
      _
    $region5: #{fully_connected_net_transposed.1} parent=1 // pred_fallthru
      _
    // Predicated region
    $region6: #{fully_connected_net_transposed.1} parent=1 // pred_check
      _
    $region7: #{fully_connected_net_transposed.1} parent=1 // pred_check_branch
      %16 = sbr.rel (0) target = $region9
    $region8: #{fully_connected_net_transposed.1} parent=1 // pred_region
      _
    $region9: #{fully_connected_net_transposed.1} parent=1 // pred_fallthru
      _
    // Predicated region
    $region10: #{fully_connected_net_transposed.1} parent=1 // pred_check
      _
    $region11: #{fully_connected_net_transposed.1} parent=1 // pred_check_branch
      %18 = sbr.rel (0) target = $region13
    $region12: #{fully_connected_net_transposed.1} parent=1 // pred_region
      _
    $region13: #{fully_connected_net_transposed.1} parent=1 // pred_fallthru
      _
    // Predicated region
    $region14: #{fully_connected_net_transposed.1} parent=1 // pred_check
      _
    $region15: #{fully_connected_net_transposed.1} parent=1 // pred_check_branch
      %20 = sbr.rel (0) target = $region17
    $region16: #{fully_connected_net_transposed.1} parent=1 // pred_region
      _
    $region17: #{fully_connected_net_transposed.1} parent=1 // pred_fallthru
      _
    // Predicated region
    $region18: #{fully_connected_net_transposed.1} parent=1 // pred_check
      _
    $region19: #{fully_connected_net_transposed.1} parent=1 // pred_check_branch
      %22 = sbr.rel (0) target = $region21
    $region20: #{fully_connected_net_transposed.1} parent=1 // pred_region
      _
    $region21: #{fully_connected_net_transposed.1} parent=1 // pred_fallthru
      _
    // Predicated region
    $region22: #{fully_connected_net_transposed.1} parent=1 // pred_check
      _
    $region23: #{fully_connected_net_transposed.1} parent=1 // pred_check_branch
      %24 = sbr.rel (0) target = $region25
    $region24: #{fully_connected_net_transposed.1} parent=1 // pred_region
      _
    $region25: #{fully_connected_net_transposed.1} parent=1 // pred_fallthru
      _
    // Predicated region
    $region26: #{fully_connected_net_transposed.1} parent=1 // pred_check
      _
    $region27: #{fully_connected_net_transposed.1} parent=1 // pred_check_branch
      %26 = sbr.rel (0) target = $region29
    $region28: #{fully_connected_net_transposed.1} parent=1 // pred_region
      _
    $region29: #{fully_connected_net_transposed.1} parent=1 // pred_fallthru
      _
    %v27 = vld [vmem:[%s0] sm:$0xff]
    %v28 = vld [vmem:[%s0 + $0x8] sm:$0xff]
    %v29 = vld [vmem:[%s0 + $0x10] sm:$0xff]
    %v30 = vld [vmem:[%s0 + $0x18] sm:$0xff]
    %v31 = vld [vmem:[%s0 + $0x20] sm:$0xff]
    %v32 = vld [vmem:[%s0 + $0x28] sm:$0xff]
    %v33 = vld [vmem:[%s0 + $0x30] sm:$0xff]
    %v34 = vld [vmem:[%s0 + $0x38] sm:$0xff]
    %v35 = vld [vmem:[%s0 + $0x40] sm:$0xff]
    %v36 = vld [vmem:[%s0 + $0x48] sm:$0xff]
    %v37 = vld [vmem:[%s0 + $0x50] sm:$0xff]
    %v38 = vld [vmem:[%s0 + $0x58] sm:$0xff]
    %v39 = vld [vmem:[%s0 + $0x60] sm:$0xff]
    %v40 = vld [vmem:[%s0 + $0x68] sm:$0xff]
    %v41 = vld [vmem:[%s0 + $0x70] sm:$0xff]
    %v42 = vld [vmem:[%s0 + $0x78] sm:$0xff]
    %v43 = vld [vmem:[%s0 + $0x80] sm:$0xff]
    %v44 = vld [vmem:[%s0 + $0x88] sm:$0xff]
    %v45 = vld [vmem:[%s0 + $0x90] sm:$0xff]
    %v46 = vld [vmem:[%s0 + $0x98] sm:$0xff]
    %v47 = vld [vmem:[%s0 + $0xa0] sm:$0xff]
    %v48 = vld [vmem:[%s0 + $0xa8] sm:$0xff]
    %v49 = vld [vmem:[%s0 + $0xb0] sm:$0xff]
    %v50 = vld [vmem:[%s0 + $0xb8] sm:$0xff]
    %v51 = vld [vmem:[%s0 + $0xc0] sm:$0xff]
    %v52 = vld [vmem:[%s0 + $0xc8] sm:$0xff]
    %v53 = vld [vmem:[%s0 + $0xd0] sm:$0xff]
    %v54 = vld [vmem:[%s0 + $0xd8] sm:$0xff]
    %v55 = vld [vmem:[%s0 + $0xe0] sm:$0xff]
    %v56 = vld [vmem:[%s0 + $0xe8] sm:$0xff]
    %v57 = vld [vmem:[%s0 + $0xf0] sm:$0xff]
    %v58 = vld [vmem:[%s0 + $0xf8] sm:$0xff]
    %v59 = vld [vmem:[%s0 + $0x100] sm:$0xff]
    %v60 = vld [vmem:[%s0 + $0x108] sm:$0xff]
    %v61 = vld [vmem:[%s0 + $0x110] sm:$0xff]
    %v62 = vld [vmem:[%s0 + $0x118] sm:$0xff]
    %v63 = vld [vmem:[%s0 + $0x120] sm:$0xff]
    %v64 = vld [vmem:[%s0 + $0x128] sm:$0xff]
    %v65 = vld [vmem:[%s0 + $0x130] sm:$0xff]
    %v66 = vld [vmem:[%s0 + $0x138] sm:$0xff]
    %v67 = vld [vmem:[%s0 + $0x140] sm:$0xff]
    %v68 = vld [vmem:[%s0 + $0x148] sm:$0xff]
    %v69 = vld [vmem:[%s0 + $0x150] sm:$0xff]
    %v70 = vld [vmem:[%s0 + $0x158] sm:$0xff]
    %v71 = vld [vmem:[%s0 + $0x160] sm:$0xff]
    %v72 = vld [vmem:[%s0 + $0x168] sm:$0xff]
    %v73 = vld [vmem:[%s0 + $0x170] sm:$0xff]
    %v74 = vld [vmem:[%s0 + $0x178] sm:$0xff]
    %v75 = vld [vmem:[%s0 + $0x180] sm:$0xff]
    %v76 = vld [vmem:[%s0 + $0x188] sm:$0xff]
    %v77 = vld [vmem:[%s1] sm:$0xff]
    %v78 = vld [vmem:[%s1 + $0x8] sm:$0xff]
    %v79 = vld [vmem:[%s1 + $0x10] sm:$0xff]
    %v80 = vld [vmem:[%s1 + $0x18] sm:$0xff]
    %v81 = vld [vmem:[%s2] sm:$0xff]
    %v82 = vld [vmem:[%s2 + $0x8] sm:$0xff]
    %v83 = vld [vmem:[%s2 + $0x10] sm:$0xff]
    %v84 = vld [vmem:[%s2 + $0x18] sm:$0xff]
    %86 = vset.pattern.permute.xlu0 0
    %87 = vperm.xlu0 %86, %v81
    %v88 = vpop.permute.xlu0 %87
    %91 = vset.pattern.permute.xlu0 0
    %92 = vperm.xlu0 %91, %v82
    %v93 = vpop.permute.xlu0 %92
    %96 = vset.pattern.permute.xlu0 0
    %97 = vperm.xlu0 %96, %v83
    %v98 = vpop.permute.xlu0 %97
    %101 = vset.pattern.permute.xlu0 0
    %102 = vperm.xlu0 %101, %v84
    %v103 = vpop.permute.xlu0 %102
    %vm105 = vcmask 130048
    %v107 = vsel %vm105, %v77, 0
    %v110 = vsel %vm105, %v78, 0
    %v113 = vsel %vm105, %v79, 0
    %v116 = vsel %vm105, %v80, 0
    %v119 = vsel %vm105, %v27, 0
    %v122 = vsel %vm105, %v28, 0
    %v125 = vsel %vm105, %v29, 0
    %v128 = vsel %vm105, %v30, 0
    %v131 = vsel %vm105, %v31, 0
    %v134 = vsel %vm105, %v32, 0
    %v137 = vsel %vm105, %v33, 0
    %v140 = vsel %vm105, %v34, 0
    %v143 = vsel %vm105, %v35, 0
    %v146 = vsel %vm105, %v36, 0
    %v149 = vsel %vm105, %v37, 0
    %v152 = vsel %vm105, %v38, 0
    %v155 = vsel %vm105, %v39, 0
    %v158 = vsel %vm105, %v40, 0
    %v161 = vsel %vm105, %v41, 0
    %v164 = vsel %vm105, %v42, 0
    %v167 = vsel %vm105, %v43, 0
    %v170 = vsel %vm105, %v44, 0
    %v173 = vsel %vm105, %v45, 0
    %v176 = vsel %vm105, %v46, 0
    %v179 = vsel %vm105, %v47, 0
    %v182 = vsel %vm105, %v48, 0
    %v185 = vsel %vm105, %v49, 0
    %v188 = vsel %vm105, %v50, 0
    %v191 = vsel %vm105, %v51, 0
    %v194 = vsel %vm105, %v52, 0
    %v197 = vsel %vm105, %v53, 0
    %v200 = vsel %vm105, %v54, 0
    %v203 = vsel %vm105, %v55, 0
    %v206 = vsel %vm105, %v56, 0
    %v209 = vsel %vm105, %v57, 0
    %v212 = vsel %vm105, %v58, 0
    %v215 = vsel %vm105, %v59, 0
    %v218 = vsel %vm105, %v60, 0
    %v221 = vsel %vm105, %v61, 0
    %v224 = vsel %vm105, %v62, 0
    %v227 = vsel %vm105, %v63, 0
    %v230 = vsel %vm105, %v64, 0
    %v233 = vsel %vm105, %v65, 0
    %v236 = vsel %vm105, %v66, 0
    %v239 = vsel %vm105, %v67, 0
    %v242 = vsel %vm105, %v68, 0
    %v245 = vsel %vm105, %v69, 0
    %v248 = vsel %vm105, %v70, 0
    %v251 = vsel %vm105, %v71, 0
    %v254 = vsel %vm105, %v72, 0
    %v257 = vsel %vm105, %v73, 0
    %v260 = vsel %vm105, %v74, 0
    %v263 = vsel %vm105, %v75, 0
    %v266 = vsel %vm105, %v76, 0
    %268 = vmatprep.subr.mxu0 0.0
    %269 = vmatpush1.xpose.msra.mxu0 %v119
    %270 = vmatprep.subr.mxu0 0.0
    %271 = vmatpush1.xpose.msra.mxu0 %v122
    %272 = vmatprep.subr.mxu0 0.0
    %273 = vmatpush1.xpose.msra.mxu0 %v125
    %274 = vmatprep.subr.mxu0 0.0
    %275 = vmatpush1.xpose.msra.mxu0 %v128
    %276 = vmatprep.subr.mxu0 0.0
    %277 = vmatpush1.xpose.msra.mxu0 %v131
    %278 = vmatprep.subr.mxu0 0.0
    %279 = vmatpush1.xpose.msra.mxu0 %v134
    %280 = vmatprep.subr.mxu0 0.0
    %281 = vmatpush1.xpose.msra.mxu0 %v137
    %282 = vmatprep.subr.mxu0 0.0
    %283 = vmatpush1.xpose.msra.mxu0 %v140
    %284 = vmatprep.subr.mxu0 0.0
    %285 = vmatpush1.xpose.msra.mxu0 %v143
    %286 = vmatprep.subr.mxu0 0.0
    %287 = vmatpush1.xpose.msra.mxu0 %v146
    %288 = vmatprep.subr.mxu0 0.0
    %289 = vmatpush1.xpose.msra.mxu0 %v149
    %290 = vmatprep.subr.mxu0 0.0
    %291 = vmatpush1.xpose.msra.mxu0 %v152
    %292 = vmatprep.subr.mxu0 0.0
    %293 = vmatpush1.xpose.msra.mxu0 %v155
    %294 = vmatprep.subr.mxu0 0.0
    %295 = vmatpush1.xpose.msra.mxu0 %v158
    %296 = vmatprep.subr.mxu0 0.0
    %297 = vmatpush1.xpose.msra.mxu0 %v161
    %298 = vmatprep.subr.mxu0 0.0
    %299 = vmatpush1.xpose.msra.mxu0 %v164
    %300 = vmatprep.subr.mxu0 0.0
    %301 = vmatpush1.xpose.msra.mxu0 %v167
    %302 = vmatprep.subr.mxu0 0.0
    %303 = vmatpush1.xpose.msra.mxu0 %v170
    %304 = vmatprep.subr.mxu0 0.0
    %305 = vmatpush1.xpose.msra.mxu0 %v173
    %306 = vmatprep.subr.mxu0 0.0
    %307 = vmatpush1.xpose.msra.mxu0 %v176
    %308 = vmatprep.subr.mxu0 0.0
    %309 = vmatpush1.xpose.msra.mxu0 %v179
    %310 = vmatprep.subr.mxu0 0.0
    %311 = vmatpush1.xpose.msra.mxu0 %v182
    %312 = vmatprep.subr.mxu0 0.0
    %313 = vmatpush1.xpose.msra.mxu0 %v185
    %314 = vmatprep.subr.mxu0 0.0
    %315 = vmatpush1.xpose.msra.mxu0 %v188
    %316 = vmatprep.subr.mxu0 0.0
    %317 = vmatpush1.xpose.msra.mxu0 %v191
    %318 = vmatprep.subr.mxu0 0.0
    %319 = vmatpush1.xpose.msra.mxu0 %v194
    %320 = vmatprep.subr.mxu0 0.0
    %321 = vmatpush1.xpose.msra.mxu0 %v197
    %322 = vmatprep.subr.mxu0 0.0
    %323 = vmatpush1.xpose.msra.mxu0 %v200
    %324 = vmatprep.subr.mxu0 0.0
    %325 = vmatpush1.xpose.msra.mxu0 %v203
    %326 = vmatprep.subr.mxu0 0.0
    %327 = vmatpush1.xpose.msra.mxu0 %v206
    %328 = vmatprep.subr.mxu0 0.0
    %329 = vmatpush1.xpose.msra.mxu0 %v209
    %330 = vmatprep.subr.mxu0 0.0
    %331 = vmatpush1.xpose.msra.mxu0 %v212
    %332 = vmatprep.mubr.f32.mxu0 0.0
    %333 = vmatmul.mubr.f32.gmra.mrb[0].mxu0 %v107
    %v334 = vpop.f32.mrb[0].mxu0
    %v335 = vadd.f32 %v88, %v334
    %v336 = vpop.f32.mrb[0].mxu0
    %v337 = vadd.f32 %v88, %v336
    %338 = vmatprep.mubr.f32.mxu0 0.0
    %339 = vmatmul.mubr.f32.gmra.mrb[0].mxu0 %v110
    %v340 = vpop.f32.mrb[0].mxu0
    %v341 = vadd.f32 %v93, %v340
    %v342 = vpop.f32.mrb[0].mxu0
    %v343 = vadd.f32 %v93, %v342
    %344 = vmatprep.mubr.f32.mxu0 0.0
    %345 = vmatmul.mubr.f32.gmra.mrb[0].mxu0 %v113
    %v346 = vpop.f32.mrb[0].mxu0
    %v347 = vadd.f32 %v98, %v346
    %v348 = vpop.f32.mrb[0].mxu0
    %v349 = vadd.f32 %v98, %v348
    %350 = vmatprep.mubr.f32.mxu0 0.0
    %351 = vmatmul.mubr.f32.gmra.mrb[0].mxu0 %v116
    %v352 = vpop.f32.mrb[0].mxu0
    %v353 = vadd.f32 %v103, %v352
    %v354 = vpop.f32.mrb[0].mxu0
    %v355 = vadd.f32 %v103, %v354
    %356 = vdwg.mxu0
    %357 = vmatprep.subr.mxu0 0.0
    %358 = vmatpush1.xpose.msra.mxu0 %v215
    %359 = vmatprep.subr.mxu0 0.0
    %360 = vmatpush1.xpose.msra.mxu0 %v218
    %361 = vmatprep.subr.mxu0 0.0
    %362 = vmatpush1.xpose.msra.mxu0 %v221
    %363 = vmatprep.subr.mxu0 0.0
    %364 = vmatpush1.xpose.msra.mxu0 %v224
    %365 = vmatprep.subr.mxu0 0.0
    %366 = vmatpush1.xpose.msra.mxu0 %v227
    %367 = vmatprep.subr.mxu0 0.0
    %368 = vmatpush1.xpose.msra.mxu0 %v230
    %369 = vmatprep.subr.mxu0 0.0
    %370 = vmatpush1.xpose.msra.mxu0 %v233
    %371 = vmatprep.subr.mxu0 0.0
    %372 = vmatpush1.xpose.msra.mxu0 %v236
    %373 = vmatprep.subr.mxu0 0.0
    %374 = vmatpush1.xpose.msra.mxu0 %v239
    %375 = vmatprep.subr.mxu0 0.0
    %376 = vmatpush1.xpose.msra.mxu0 %v242
    %377 = vmatprep.subr.mxu0 0.0
    %378 = vmatpush1.xpose.msra.mxu0 %v245
    %379 = vmatprep.subr.mxu0 0.0
    %380 = vmatpush1.xpose.msra.mxu0 %v248
    %381 = vmatprep.subr.mxu0 0.0
    %382 = vmatpush1.xpose.msra.mxu0 %v251
    %383 = vmatprep.subr.mxu0 0.0
    %384 = vmatpush1.xpose.msra.mxu0 %v254
    %385 = vmatprep.subr.mxu0 0.0
    %386 = vmatpush1.xpose.msra.mxu0 %v257
    %387 = vmatprep.subr.mxu0 0.0
    %388 = vmatpush1.xpose.msra.mxu0 %v260
    %389 = vmatprep.subr.mxu0 0.0
    %390 = vmatpush1.xpose.msra.mxu0 %v263
    %391 = vmatprep.subr.mxu0 0.0
    %392 = vmatpush1.xpose.msra.mxu0 %v266
    %393 = vmatprep.subr.mxu0 0.0
    %394 = vmatpush1.xpose.msra.mxu0 0.0
    %395 = vmatprep.subr.mxu0 0.0
    %396 = vmatpush1.xpose.msra.mxu0 0.0
    %397 = vmatprep.subr.mxu0 0.0
    %398 = vmatpush1.xpose.msra.mxu0 0.0
    %399 = vmatprep.subr.mxu0 0.0
    %400 = vmatpush1.xpose.msra.mxu0 0.0
    %401 = vmatprep.subr.mxu0 0.0
    %402 = vmatpush1.xpose.msra.mxu0 0.0
    %403 = vmatprep.subr.mxu0 0.0
    %404 = vmatpush1.xpose.msra.mxu0 0.0
    %405 = vmatprep.subr.mxu0 0.0
    %406 = vmatpush1.xpose.msra.mxu0 0.0
    %407 = vmatprep.subr.mxu0 0.0
    %408 = vmatpush1.xpose.msra.mxu0 0.0
    %409 = vmatprep.subr.mxu0 0.0
    %410 = vmatpush1.xpose.msra.mxu0 0.0
    %411 = vmatprep.subr.mxu0 0.0
    %412 = vmatpush1.xpose.msra.mxu0 0.0
    %413 = vmatprep.subr.mxu0 0.0
    %414 = vmatpush1.xpose.msra.mxu0 0.0
    %415 = vmatprep.subr.mxu0 0.0
    %416 = vmatpush1.xpose.msra.mxu0 0.0
    %417 = vmatprep.subr.mxu0 0.0
    %418 = vmatpush1.xpose.msra.mxu0 0.0
    %419 = vmatprep.subr.mxu0 0.0
    %420 = vmatpush1.xpose.msra.mxu0 0.0
    %421 = vmatprep.mubr.f32.mxu0 0.0
    %422 = vmatmul.mubr.f32.gmra.mrb[0].mxu0 %v107
    %v423 = vpop.f32.mrb[0].mxu0
    %v424 = vadd.f32 %v88, %v423
    %v425 = vpop.f32.mrb[0].mxu0
    %v426 = vadd.f32 %v88, %v425
    %427 = vmatprep.mubr.f32.mxu0 0.0
    %428 = vmatmul.mubr.f32.gmra.mrb[0].mxu0 %v110
    %v429 = vpop.f32.mrb[0].mxu0
    %v430 = vadd.f32 %v93, %v429
    %v431 = vpop.f32.mrb[0].mxu0
    %v432 = vadd.f32 %v93, %v431
    %433 = vmatprep.mubr.f32.mxu0 0.0
    %434 = vmatmul.mubr.f32.gmra.mrb[0].mxu0 %v113
    %v435 = vpop.f32.mrb[0].mxu0
    %v436 = vadd.f32 %v98, %v435
    %v437 = vpop.f32.mrb[0].mxu0
    %v438 = vadd.f32 %v98, %v437
    %439 = vmatprep.mubr.f32.mxu0 0.0
    %440 = vmatmul.mubr.f32.gmra.mrb[0].mxu0 %v116
    %v441 = vpop.f32.mrb[0].mxu0
    %v442 = vadd.f32 %v103, %v441
    %v443 = vpop.f32.mrb[0].mxu0
    %v444 = vadd.f32 %v103, %v443
    %445 = vdwg.mxu0
    %v446 = vmax.f32 %v335, 0.0
    %v447 = vmax.f32 %v337, 0.0
    %v448 = vmax.f32 %v424, 0.0
    %v449 = vmax.f32 %v426, 0.0
    %v450 = vmax.f32 %v341, 0.0
    %v451 = vmax.f32 %v343, 0.0
    %v452 = vmax.f32 %v430, 0.0
    %v453 = vmax.f32 %v432, 0.0
    %v454 = vmax.f32 %v347, 0.0
    %v455 = vmax.f32 %v349, 0.0
    %v456 = vmax.f32 %v436, 0.0
    %v457 = vmax.f32 %v438, 0.0
    %v458 = vmax.f32 %v353, 0.0
    %v459 = vmax.f32 %v355, 0.0
    %v460 = vmax.f32 %v442, 0.0
    %v461 = vmax.f32 %v444, 0.0
    %v462 = vld [vmem:[%s3] sm:$0xff]
    %v463 = vld [vmem:[%s3 + $0x8] sm:$0xff]
    %v464 = vld [vmem:[%s3 + $0x10] sm:$0xff]
    %v465 = vld [vmem:[%s3 + $0x18] sm:$0xff]
    %v466 = vld [vmem:[%s4] sm:$0xff]
    %v467 = vld [vmem:[%s4 + $0x8] sm:$0xff]
    %v468 = vld [vmem:[%s4 + $0x10] sm:$0xff]
    %v469 = vld [vmem:[%s4 + $0x18] sm:$0xff]
    %471 = vset.pattern.permute.xlu0 0
    %472 = vperm.xlu0 %471, %v466
    %v473 = vpop.permute.xlu0 %472
    %476 = vset.pattern.permute.xlu0 0
    %477 = vperm.xlu0 %476, %v467
    %v478 = vpop.permute.xlu0 %477
    %481 = vset.pattern.permute.xlu0 0
    %482 = vperm.xlu0 %481, %v468
    %v483 = vpop.permute.xlu0 %482
    %486 = vset.pattern.permute.xlu0 0
    %487 = vperm.xlu0 %486, %v469
    %v488 = vpop.permute.xlu0 %487
    %vm490 = vcmask 261120
    %v492 = vsel %vm490, %v462, 0
    %v495 = vsel %vm490, %v463, 0
    %v498 = vsel %vm490, %v464, 0
    %v501 = vsel %vm490, %v465, 0
    %503 = vmatprep.subr.mxu0 %v447
    %504 = vmatpush1.msra.mxu0 %v446
    %505 = vmatprep.subr.mxu0 %v451
    %506 = vmatpush1.msra.mxu0 %v450
    %507 = vmatprep.subr.mxu0 %v455
    %508 = vmatpush1.msra.mxu0 %v454
    %509 = vmatprep.subr.mxu0 %v459
    %510 = vmatpush1.msra.mxu0 %v458
    %511 = vmatprep.subr.mxu0 0.0
    %512 = vmatpush1.msra.mxu0 0.0
    %513 = vmatprep.subr.mxu0 0.0
    %514 = vmatpush1.msra.mxu0 0.0
    %515 = vmatprep.subr.mxu0 0.0
    %516 = vmatpush1.msra.mxu0 0.0
    %517 = vmatprep.subr.mxu0 0.0
    %518 = vmatpush1.msra.mxu0 0.0
    %519 = vmatprep.subr.mxu0 0.0
    %520 = vmatpush1.msra.mxu0 0.0
    %521 = vmatprep.subr.mxu0 0.0
    %522 = vmatpush1.msra.mxu0 0.0
    %523 = vmatprep.subr.mxu0 0.0
    %524 = vmatpush1.msra.mxu0 0.0
    %525 = vmatprep.subr.mxu0 0.0
    %526 = vmatpush1.msra.mxu0 0.0
    %527 = vmatprep.subr.mxu0 0.0
    %528 = vmatpush1.msra.mxu0 0.0
    %529 = vmatprep.subr.mxu0 0.0
    %530 = vmatpush1.msra.mxu0 0.0
    %531 = vmatprep.subr.mxu0 0.0
    %532 = vmatpush1.msra.mxu0 0.0
    %533 = vmatprep.subr.mxu0 0.0
    %534 = vmatpush1.msra.mxu0 0.0
    %535 = vmatprep.subr.mxu0 0.0
    %536 = vmatpush1.msra.mxu0 0.0
    %537 = vmatprep.subr.mxu0 0.0
    %538 = vmatpush1.msra.mxu0 0.0
    %539 = vmatprep.subr.mxu0 0.0
    %540 = vmatpush1.msra.mxu0 0.0
    %541 = vmatprep.subr.mxu0 0.0
    %542 = vmatpush1.msra.mxu0 0.0
    %543 = vmatprep.subr.mxu0 0.0
    %544 = vmatpush1.msra.mxu0 0.0
    %545 = vmatprep.subr.mxu0 0.0
    %546 = vmatpush1.msra.mxu0 0.0
    %547 = vmatprep.subr.mxu0 0.0
    %548 = vmatpush1.msra.mxu0 0.0
    %549 = vmatprep.subr.mxu0 0.0
    %550 = vmatpush1.msra.mxu0 0.0
    %551 = vmatprep.subr.mxu0 0.0
    %552 = vmatpush1.msra.mxu0 0.0
    %553 = vmatprep.subr.mxu0 0.0
    %554 = vmatpush1.msra.mxu0 0.0
    %555 = vmatprep.subr.mxu0 0.0
    %556 = vmatpush1.msra.mxu0 0.0
    %557 = vmatprep.subr.mxu0 0.0
    %558 = vmatpush1.msra.mxu0 0.0
    %559 = vmatprep.subr.mxu0 0.0
    %560 = vmatpush1.msra.mxu0 0.0
    %561 = vmatprep.subr.mxu0 0.0
    %562 = vmatpush1.msra.mxu0 0.0
    %563 = vmatprep.subr.mxu0 0.0
    %564 = vmatpush1.msra.mxu0 0.0
    %565 = vmatprep.subr.mxu0 0.0
    %566 = vmatpush1.msra.mxu0 0.0
    %567 = vmatprep.mubr.f32.mxu0 0.0
    %568 = vmatmul.mubr.f32.gmra.mrb[0].mxu0 %v492
    %v569 = vpop.f32.mrb[0].mxu0
    %v570 = vadd.f32 %v473, %v569
    %v571 = vpop.f32.mrb[0].mxu0
    %v572 = vadd.f32 %v473, %v571
    %573 = vmatprep.mubr.f32.mxu0 0.0
    %574 = vmatmul.mubr.f32.gmra.mrb[0].mxu0 %v495
    %v575 = vpop.f32.mrb[0].mxu0
    %v576 = vadd.f32 %v478, %v575
    %v577 = vpop.f32.mrb[0].mxu0
    %v578 = vadd.f32 %v478, %v577
    %579 = vmatprep.mubr.f32.mxu0 0.0
    %580 = vmatmul.mubr.f32.gmra.mrb[0].mxu0 %v498
    %v581 = vpop.f32.mrb[0].mxu0
    %v582 = vadd.f32 %v483, %v581
    %v583 = vpop.f32.mrb[0].mxu0
    %v584 = vadd.f32 %v483, %v583
    %585 = vmatprep.mubr.f32.mxu0 0.0
    %586 = vmatmul.mubr.f32.gmra.mrb[0].mxu0 %v501
    %v587 = vpop.f32.mrb[0].mxu0
    %v588 = vadd.f32 %v488, %v587
    %v589 = vpop.f32.mrb[0].mxu0
    %v590 = vadd.f32 %v488, %v589
    %591 = vdwg.mxu0
    %592 = vmatprep.subr.mxu0 %v449
    %593 = vmatpush1.msra.mxu0 %v448
    %594 = vmatprep.subr.mxu0 %v453
    %595 = vmatpush1.msra.mxu0 %v452
    %596 = vmatprep.subr.mxu0 %v457
    %597 = vmatpush1.msra.mxu0 %v456
    %598 = vmatprep.subr.mxu0 %v461
    %599 = vmatpush1.msra.mxu0 %v460
    %600 = vmatprep.subr.mxu0 0.0
    %601 = vmatpush1.msra.mxu0 0.0
    %602 = vmatprep.subr.mxu0 0.0
    %603 = vmatpush1.msra.mxu0 0.0
    %604 = vmatprep.subr.mxu0 0.0
    %605 = vmatpush1.msra.mxu0 0.0
    %606 = vmatprep.subr.mxu0 0.0
    %607 = vmatpush1.msra.mxu0 0.0
    %608 = vmatprep.subr.mxu0 0.0
    %609 = vmatpush1.msra.mxu0 0.0
    %610 = vmatprep.subr.mxu0 0.0
    %611 = vmatpush1.msra.mxu0 0.0
    %612 = vmatprep.subr.mxu0 0.0
    %613 = vmatpush1.msra.mxu0 0.0
    %614 = vmatprep.subr.mxu0 0.0
    %615 = vmatpush1.msra.mxu0 0.0
    %616 = vmatprep.subr.mxu0 0.0
    %617 = vmatpush1.msra.mxu0 0.0
    %618 = vmatprep.subr.mxu0 0.0
    %619 = vmatpush1.msra.mxu0 0.0
    %620 = vmatprep.subr.mxu0 0.0
    %621 = vmatpush1.msra.mxu0 0.0
    %622 = vmatprep.subr.mxu0 0.0
    %623 = vmatpush1.msra.mxu0 0.0
    %624 = vmatprep.subr.mxu0 0.0
    %625 = vmatpush1.msra.mxu0 0.0
    %626 = vmatprep.subr.mxu0 0.0
    %627 = vmatpush1.msra.mxu0 0.0
    %628 = vmatprep.subr.mxu0 0.0
    %629 = vmatpush1.msra.mxu0 0.0
    %630 = vmatprep.subr.mxu0 0.0
    %631 = vmatpush1.msra.mxu0 0.0
    %632 = vmatprep.subr.mxu0 0.0
    %633 = vmatpush1.msra.mxu0 0.0
    %634 = vmatprep.subr.mxu0 0.0
    %635 = vmatpush1.msra.mxu0 0.0
    %636 = vmatprep.subr.mxu0 0.0
    %637 = vmatpush1.msra.mxu0 0.0
    %638 = vmatprep.subr.mxu0 0.0
    %639 = vmatpush1.msra.mxu0 0.0
    %640 = vmatprep.subr.mxu0 0.0
    %641 = vmatpush1.msra.mxu0 0.0
    %642 = vmatprep.subr.mxu0 0.0
    %643 = vmatpush1.msra.mxu0 0.0
    %644 = vmatprep.subr.mxu0 0.0
    %645 = vmatpush1.msra.mxu0 0.0
    %646 = vmatprep.subr.mxu0 0.0
    %647 = vmatpush1.msra.mxu0 0.0
    %648 = vmatprep.subr.mxu0 0.0
    %649 = vmatpush1.msra.mxu0 0.0
    %650 = vmatprep.subr.mxu0 0.0
    %651 = vmatpush1.msra.mxu0 0.0
    %652 = vmatprep.subr.mxu0 0.0
    %653 = vmatpush1.msra.mxu0 0.0
    %654 = vmatprep.subr.mxu0 0.0
    %655 = vmatpush1.msra.mxu0 0.0
    %656 = vmatprep.mubr.f32.mxu0 0.0
    %657 = vmatmul.mubr.f32.gmra.mrb[0].mxu0 %v492
    %v658 = vpop.f32.mrb[0].mxu0
    %v659 = vadd.f32 %v473, %v658
    %v660 = vpop.f32.mrb[0].mxu0
    %v661 = vadd.f32 %v473, %v660
    %662 = vmatprep.mubr.f32.mxu0 0.0
    %663 = vmatmul.mubr.f32.gmra.mrb[0].mxu0 %v495
    %v664 = vpop.f32.mrb[0].mxu0
    %v665 = vadd.f32 %v478, %v664
    %v666 = vpop.f32.mrb[0].mxu0
    %v667 = vadd.f32 %v478, %v666
    %668 = vmatprep.mubr.f32.mxu0 0.0
    %669 = vmatmul.mubr.f32.gmra.mrb[0].mxu0 %v498
    %v670 = vpop.f32.mrb[0].mxu0
    %v671 = vadd.f32 %v483, %v670
    %v672 = vpop.f32.mrb[0].mxu0
    %v673 = vadd.f32 %v483, %v672
    %674 = vmatprep.mubr.f32.mxu0 0.0
    %675 = vmatmul.mubr.f32.gmra.mrb[0].mxu0 %v501
    %v676 = vpop.f32.mrb[0].mxu0
    %v677 = vadd.f32 %v488, %v676
    %v678 = vpop.f32.mrb[0].mxu0
    %v679 = vadd.f32 %v488, %v678
    %680 = vdwg.mxu0
    %v681 = vmax.f32 %v570, 0.0
    %v682 = vmax.f32 %v572, 0.0
    %v683 = vmax.f32 %v659, 0.0
    %v684 = vmax.f32 %v661, 0.0
    %v685 = vmax.f32 %v576, 0.0
    %v686 = vmax.f32 %v578, 0.0
    %v687 = vmax.f32 %v665, 0.0
    %v688 = vmax.f32 %v667, 0.0
    %v689 = vmax.f32 %v582, 0.0
    %v690 = vmax.f32 %v584, 0.0
    %v691 = vmax.f32 %v671, 0.0
    %v692 = vmax.f32 %v673, 0.0
    %v693 = vmax.f32 %v588, 0.0
    %v694 = vmax.f32 %v590, 0.0
    %v695 = vmax.f32 %v677, 0.0
    %v696 = vmax.f32 %v679, 0.0
    %v697 = vld [vmem:[%s5] sm:$0xff]
    %v698 = vld [vmem:[%s6] sm:$0xff]
    %700 = vset.pattern.permute.xlu0 0
    %701 = vperm.xlu0 %700, %v698
    %v702 = vpop.permute.xlu0 %701
    %v705 = vsel %vm490, %v697, 0
    %707 = vmatprep.subr.mxu0 %v682
    %708 = vmatpush1.msra.mxu0 %v681
    %709 = vmatprep.subr.mxu0 %v686
    %710 = vmatpush1.msra.mxu0 %v685
    %711 = vmatprep.subr.mxu0 %v690
    %712 = vmatpush1.msra.mxu0 %v689
    %713 = vmatprep.subr.mxu0 %v694
    %714 = vmatpush1.msra.mxu0 %v693
    %715 = vmatprep.subr.mxu0 0.0
    %716 = vmatpush1.msra.mxu0 0.0
    %717 = vmatprep.subr.mxu0 0.0
    %718 = vmatpush1.msra.mxu0 0.0
    %719 = vmatprep.subr.mxu0 0.0
    %720 = vmatpush1.msra.mxu0 0.0
    %721 = vmatprep.subr.mxu0 0.0
    %722 = vmatpush1.msra.mxu0 0.0
    %723 = vmatprep.subr.mxu0 0.0
    %724 = vmatpush1.msra.mxu0 0.0
    %725 = vmatprep.subr.mxu0 0.0
    %726 = vmatpush1.msra.mxu0 0.0
    %727 = vmatprep.subr.mxu0 0.0
    %728 = vmatpush1.msra.mxu0 0.0
    %729 = vmatprep.subr.mxu0 0.0
    %730 = vmatpush1.msra.mxu0 0.0
    %731 = vmatprep.subr.mxu0 0.0
    %732 = vmatpush1.msra.mxu0 0.0
    %733 = vmatprep.subr.mxu0 0.0
    %734 = vmatpush1.msra.mxu0 0.0
    %735 = vmatprep.subr.mxu0 0.0
    %736 = vmatpush1.msra.mxu0 0.0
    %737 = vmatprep.subr.mxu0 0.0
    %738 = vmatpush1.msra.mxu0 0.0
    %739 = vmatprep.subr.mxu0 0.0
    %740 = vmatpush1.msra.mxu0 0.0
    %741 = vmatprep.subr.mxu0 0.0
    %742 = vmatpush1.msra.mxu0 0.0
    %743 = vmatprep.subr.mxu0 0.0
    %744 = vmatpush1.msra.mxu0 0.0
    %745 = vmatprep.subr.mxu0 0.0
    %746 = vmatpush1.msra.mxu0 0.0
    %747 = vmatprep.subr.mxu0 0.0
    %748 = vmatpush1.msra.mxu0 0.0
    %749 = vmatprep.subr.mxu0 0.0
    %750 = vmatpush1.msra.mxu0 0.0
    %751 = vmatprep.subr.mxu0 0.0
    %752 = vmatpush1.msra.mxu0 0.0
    %753 = vmatprep.subr.mxu0 0.0
    %754 = vmatpush1.msra.mxu0 0.0
    %755 = vmatprep.subr.mxu0 0.0
    %756 = vmatpush1.msra.mxu0 0.0
    %757 = vmatprep.subr.mxu0 0.0
    %758 = vmatpush1.msra.mxu0 0.0
    %759 = vmatprep.subr.mxu0 0.0
    %760 = vmatpush1.msra.mxu0 0.0
    %761 = vmatprep.subr.mxu0 0.0
    %762 = vmatpush1.msra.mxu0 0.0
    %763 = vmatprep.subr.mxu0 0.0
    %764 = vmatpush1.msra.mxu0 0.0
    %765 = vmatprep.subr.mxu0 0.0
    %766 = vmatpush1.msra.mxu0 0.0
    %767 = vmatprep.subr.mxu0 0.0
    %768 = vmatpush1.msra.mxu0 0.0
    %769 = vmatprep.subr.mxu0 0.0
    %770 = vmatpush1.msra.mxu0 0.0
    %771 = vmatprep.mubr.f32.mxu0 0.0
    %772 = vmatmul.mubr.f32.gmra.mrb[0].mxu0 %v705
    %v773 = vpop.f32.mrb[0].mxu0
    %v774 = vadd.f32 %v702, %v773
    %v775 = vpop.f32.mrb[0].mxu0
    %v776 = vadd.f32 %v702, %v775
    %777 = vdwg.mxu0
    %778 = vmatprep.subr.mxu0 %v684
    %779 = vmatpush1.msra.mxu0 %v683
    %780 = vmatprep.subr.mxu0 %v688
    %781 = vmatpush1.msra.mxu0 %v687
    %782 = vmatprep.subr.mxu0 %v692
    %783 = vmatpush1.msra.mxu0 %v691
    %784 = vmatprep.subr.mxu0 %v696
    %785 = vmatpush1.msra.mxu0 %v695
    %786 = vmatprep.subr.mxu0 0.0
    %787 = vmatpush1.msra.mxu0 0.0
    %788 = vmatprep.subr.mxu0 0.0
    %789 = vmatpush1.msra.mxu0 0.0
    %790 = vmatprep.subr.mxu0 0.0
    %791 = vmatpush1.msra.mxu0 0.0
    %792 = vmatprep.subr.mxu0 0.0
    %793 = vmatpush1.msra.mxu0 0.0
    %794 = vmatprep.subr.mxu0 0.0
    %795 = vmatpush1.msra.mxu0 0.0
    %796 = vmatprep.subr.mxu0 0.0
    %797 = vmatpush1.msra.mxu0 0.0
    %798 = vmatprep.subr.mxu0 0.0
    %799 = vmatpush1.msra.mxu0 0.0
    %800 = vmatprep.subr.mxu0 0.0
    %801 = vmatpush1.msra.mxu0 0.0
    %802 = vmatprep.subr.mxu0 0.0
    %803 = vmatpush1.msra.mxu0 0.0
    %804 = vmatprep.subr.mxu0 0.0
    %805 = vmatpush1.msra.mxu0 0.0
    %806 = vmatprep.subr.mxu0 0.0
    %807 = vmatpush1.msra.mxu0 0.0
    %808 = vmatprep.subr.mxu0 0.0
    %809 = vmatpush1.msra.mxu0 0.0
    %810 = vmatprep.subr.mxu0 0.0
    %811 = vmatpush1.msra.mxu0 0.0
    %812 = vmatprep.subr.mxu0 0.0
    %813 = vmatpush1.msra.mxu0 0.0
    %814 = vmatprep.subr.mxu0 0.0
    %815 = vmatpush1.msra.mxu0 0.0
    %816 = vmatprep.subr.mxu0 0.0
    %817 = vmatpush1.msra.mxu0 0.0
    %818 = vmatprep.subr.mxu0 0.0
    %819 = vmatpush1.msra.mxu0 0.0
    %820 = vmatprep.subr.mxu0 0.0
    %821 = vmatpush1.msra.mxu0 0.0
    %822 = vmatprep.subr.mxu0 0.0
    %823 = vmatpush1.msra.mxu0 0.0
    %824 = vmatprep.subr.mxu0 0.0
    %825 = vmatpush1.msra.mxu0 0.0
    %826 = vmatprep.subr.mxu0 0.0
    %827 = vmatpush1.msra.mxu0 0.0
    %828 = vmatprep.subr.mxu0 0.0
    %829 = vmatpush1.msra.mxu0 0.0
    %830 = vmatprep.subr.mxu0 0.0
    %831 = vmatpush1.msra.mxu0 0.0
    %832 = vmatprep.subr.mxu0 0.0
    %833 = vmatpush1.msra.mxu0 0.0
    %834 = vmatprep.subr.mxu0 0.0
    %835 = vmatpush1.msra.mxu0 0.0
    %836 = vmatprep.subr.mxu0 0.0
    %837 = vmatpush1.msra.mxu0 0.0
    %838 = vmatprep.subr.mxu0 0.0
    %839 = vmatpush1.msra.mxu0 0.0
    %840 = vmatprep.subr.mxu0 0.0
    %841 = vmatpush1.msra.mxu0 0.0
    %842 = vmatprep.mubr.f32.mxu0 0.0
    %843 = vmatmul.mubr.f32.gmra.mrb[0].mxu0 %v705
    %v844 = vpop.f32.mrb[0].mxu0
    %v845 = vadd.f32 %v702, %v844
    %v846 = vpop.f32.mrb[0].mxu0
    %v847 = vadd.f32 %v702, %v846
    %848 = vdwg.mxu0
    %849 = vst [vmem:[#allocation2] sm:$0xff] %v774
    %850 = vst [vmem:[#allocation2 + $0x8] sm:$0xff] %v776
    %851 = vst [vmem:[#allocation2 + $0x10] sm:$0xff] %v845
    %852 = vst.msk [vmem:[#allocation2 + $0x18] sm:$0xff] %vm105, %v847
    // Predicated region
    $region30: #{fully_connected_net_transposed.1} parent=1 // pred_check
      _
    $region31: #{fully_connected_net_transposed.1} parent=1 // pred_check_branch
      %854 = sbr.rel (0) target = $region33
    $region32: #{fully_connected_net_transposed.1} parent=1 // pred_region
      %s856 = ssub.s32 512, 512
      %857 = vsyncadd [#allocation3], %s856
      %s859 = sshll.u32 [#allocation2], 4
      %s860 = int_to_ptr.vmem [resolvable:$true] %s859
      %862 = dma.vmem_to_hbm [thread:$0]  %s860, 512, %s7, [#allocation3]
    $region33: #{fully_connected_net_transposed.1} parent=1 // pred_fallthru
      _
    // Predicated region
    $region34: #{fully_connected_net_transposed.1} parent=1 // pred_check
      _
    $region35: #{fully_connected_net_transposed.1} parent=1 // pred_check_branch
      %864 = sbr.rel (0) target = $region37
    $region36: #{fully_connected_net_transposed.1} parent=1 // pred_region
      %865 = dma.done [#allocation3], 512
    $region37: #{fully_connected_net_transposed.1} parent=1 // pred_fallthru
      _
    %866 = vsyncpa [#allocation3], 1

</llo_original>
